<compile_context>
chip_gen: v5e
topology: v5e:2x2
jax: 0.10.0
libtpu: 0.0.40
codegen_flags: <defaults>
</compile_context>

<pallas_src>
import math

import jax
import jax.numpy as jnp
from jax.experimental import pallas as pl
from jax.experimental.pallas import tpu as pltpu


def _ffn_softmax_kernel(x_ref, w1_ref, b1_ref, w2_ref, b2_ref, o_ref, h_ref):
    # fc1 + tanh: MXU matmul with f32 accumulation, tanh on the EUP in f32.
    # The hidden activation is stored in the matmul dtype (bf16 by default) so the
    # second dot consumes it directly (no extra astype, half the scratch traffic).
    h_ref[...] = jnp.tanh(
        jnp.dot(x_ref[...], w1_ref[...], preferred_element_type=jnp.float32)
        + b1_ref[...]
    ).astype(h_ref.dtype)

    # fc2: logits at the true output width (no padded columns).
    logits = (
        jnp.dot(h_ref[...], w2_ref[...], preferred_element_type=jnp.float32)
        + b2_ref[...]
    )

    # Numerically stable softmax over the last axis, all in f32.
    # Exact division (not approx reciprocal) so rows sum to 1 to f32 precision.
    m = jnp.max(logits, axis=-1, keepdims=True)
    e = jnp.exp(logits - m)
    s = jnp.sum(e, axis=-1, keepdims=True)
    o_ref[...] = (e / s).astype(o_ref.dtype)


def _round_up(n, m):
    return ((n + m - 1) // m) * m


def prepare_params(w1, b1, w2, b2, *, matmul_dtype=jnp.bfloat16):
    """One-time cast of the (static) parameters; call once and reuse to avoid
    re-emitting the small convert ops on every forward."""
    dt = jnp.dtype(matmul_dtype)
    return (
        jnp.asarray(w1, dt),
        jnp.asarray(b1, jnp.float32).reshape(1, -1),
        jnp.asarray(w2, dt),
        jnp.asarray(b2, jnp.float32).reshape(1, -1),
    )


def feedforward_softmax(x, w1, b1, w2, b2, *, tile_b=4096, matmul_dtype=jnp.bfloat16):
    """x: (B, in), w1: (in, 64), b1: (64,) or (1, 64), w2: (64, out), b2: (out,) or (1, out).

    matmul_dtype: MXU input dtype.  Default bf16 halves the x HBM stream (the dominant
    traffic); note x itself is quantized to bf16 (~3 significant digits) before the first
    matmul.  Pass jnp.float32 for a full-precision path.  Accumulation / tanh / softmax
    are always f32.
    """
    B, in_size = x.shape
    hidden = w1.shape[-1]
    out_size = w2.shape[-1]

    dt = jnp.dtype(matmul_dtype) if matmul_dtype is not None else jnp.dtype(x.dtype)

    # Casts are no-ops if prepare_params() was already applied with the same dtype.
    x_c = x.astype(dt)
    w1_c = jnp.asarray(w1, dt)
    w2_c = jnp.asarray(w2, dt)
    b1_c = jnp.asarray(b1, jnp.float32).reshape(1, hidden)
    b2_c = jnp.asarray(b2, jnp.float32).reshape(1, out_size)

    # ---- batch tiling ----------------------------------------------------------------
    tile_b = max(8, (int(tile_b) // 8) * 8)
    # Aim for >= 2 grid steps whenever the batch allows it, so "parallel" batch-axis
    # semantics actually populate both TensorCores on v7x (harmless on v5e/v6e).
    tile_b = min(tile_b, max(8, _round_up(-(-B // 2), 8)))
    # VMEM budget clamp: 2x double-buffered x/out tiles + hidden scratch + resident
    # weights must fit comfortably under every generation's default scoped VMEM
    # (v5e 16 MiB, v6e/v7x 32 MiB).  12 MiB leaves plenty of headroom.
    budget = 12 << 20
    per_row = 2 * in_size * dt.itemsize + 2 * out_size * 4 + hidden * dt.itemsize
    fixed = (in_size * hidden + hidden * out_size) * dt.itemsize + (hidden + out_size) * 4
    max_rows = max(8, (((budget - fixed) // max(per_row, 1)) // 8) * 8)
    tile_b = min(tile_b, max_rows)
    if tile_b > B:
        tile_b = B  # single block equal to the full (small) batch dim -- legal block shape

    grid = (pl.cdiv(B, tile_b),)

    cost = pl.CostEstimate(
        flops=int(2 * B * (in_size * hidden + hidden * out_size)),
        transcendentals=int(B * (hidden + out_size)),
        bytes_accessed=int(
            B * in_size * dt.itemsize                              # x streamed in
            + (in_size * hidden + hidden * out_size) * dt.itemsize  # weights (VMEM resident)
            + (hidden + out_size) * 4                               # biases
            + B * out_size * 4                                      # output streamed out
        ),
    )

    return pl.pallas_call(
        _ffn_softmax_kernel,
        out_shape=jax.ShapeDtypeStruct((B, out_size), jnp.float32),
        grid_spec=pltpu.PrefetchScalarGridSpec(
            num_scalar_prefetch=0,
            grid=grid,
            in_specs=[
                pl.BlockSpec((tile_b, in_size), lambda i: (i, 0)),   # x tile per step
                pl.BlockSpec((in_size, hidden), lambda i: (0, 0)),   # W1 (VMEM resident)
                pl.BlockSpec((1, hidden), lambda i: (0, 0)),         # b1
                pl.BlockSpec((hidden, out_size), lambda i: (0, 0)),  # W2 (VMEM resident)
                pl.BlockSpec((1, out_size), lambda i: (0, 0)),       # b2
            ],
            out_specs=pl.BlockSpec((tile_b, out_size), lambda i: (i, 0)),
            scratch_shapes=[pltpu.VMEM((tile_b, hidden), dt)],       # hidden activations
        ),
        compiler_params=pltpu.CompilerParams(
            dimension_semantics=("parallel",),  # batch axis: megacore sharding on v7x
        ),
        cost_estimate=cost,
    )(x_c, w1_c, b1_c, w2_c, b2_c)


def _xavier_uniform(key, fan_in, fan_out, dtype=jnp.float32):
    # matches torch.nn.init.xavier_uniform_ (gain=1)
    bound = math.sqrt(6.0 / (fan_in + fan_out))
    return jax.random.uniform(
        key, (fan_in, fan_out), dtype=dtype, minval=-bound, maxval=bound
    )


def init_params(key, input_size, output_size, hidden=64):
    k1, k2, k3, k4 = jax.random.split(key, 4)
    # weights: xavier uniform (as in the module); stored as (in, out)
    w1 = _xavier_uniform(k1, input_size, hidden)
    w2 = _xavier_uniform(k2, hidden, output_size)
    # biases: PyTorch Linear default init U(-1/sqrt(fan_in), 1/sqrt(fan_in))
    b1_bound = 1.0 / math.sqrt(input_size)
    b2_bound = 1.0 / math.sqrt(hidden)
    b1 = jax.random.uniform(k3, (1, hidden), minval=-b1_bound, maxval=b1_bound)
    b2 = jax.random.uniform(k4, (1, output_size), minval=-b2_bound, maxval=b2_bound)
    return w1, b1, w2, b2


if __name__ == "__main__":
    key = jax.random.PRNGKey(0)
    batch, input_size, output_size = 8, 32, 16

    kx, kp = jax.random.split(key)
    x = jax.random.normal(kx, (batch, input_size), dtype=jnp.float32)
    w1, b1, w2, b2 = init_params(kp, input_size, output_size)

    ref = jax.nn.softmax(jnp.tanh(x @ w1 + b1) @ w2 + b2, axis=-1)

    # --- f32 MXU-input path: tight check --------------------------------------------
    out_f32 = jax.block_until_ready(
        feedforward_softmax(x, w1, b1, w2, b2, matmul_dtype=jnp.float32))
    assert out_f32.shape == (batch, output_size)
    assert bool(jnp.all(jnp.isfinite(out_f32)))
    assert jnp.allclose(out_f32, ref, atol=1e-3, rtol=1e-3)
    assert jnp.allclose(jnp.sum(out_f32, axis=-1), 1.0, atol=1e-4)

    # --- default bf16 MXU-input path (HBM-bandwidth win); math stays f32 -------------
    out = jax.block_until_ready(feedforward_softmax(x, w1, b1, w2, b2))
    assert out.shape == (batch, output_size)
    assert jnp.allclose(out, ref, atol=3e-2, rtol=3e-2)
    assert jnp.allclose(jnp.sum(out, axis=-1), 1.0, atol=1e-4)

    # --- larger, non-tile-aligned batch: exercises the 2-step grid + ragged last block
    xb = jax.random.normal(jax.random.PRNGKey(1), (1000, input_size), dtype=jnp.float32)
    refb = jax.nn.softmax(jnp.tanh(xb @ w1 + b1) @ w2 + b2, axis=-1)
    outb = jax.block_until_ready(
        feedforward_softmax(xb, w1, b1, w2, b2, tile_b=512, matmul_dtype=jnp.float32))
    assert outb.shape == (1000, output_size)
    assert jnp.allclose(outb, refb, atol=1e-3, rtol=1e-3)
    assert jnp.allclose(jnp.sum(outb, axis=-1), 1.0, atol=1e-4)

    # --- hoisted-param (prepare_params) bf16 path on the large batch ------------------
    p_bf16 = prepare_params(w1, b1, w2, b2, matmul_dtype=jnp.bfloat16)
    outb16 = jax.block_until_ready(feedforward_softmax(xb, *p_bf16))
    assert outb16.shape == (1000, output_size)
    assert jnp.allclose(outb16, refb, atol=3e-2, rtol=3e-2)
    assert jnp.allclose(jnp.sum(outb16, axis=-1), 1.0, atol=1e-4)

    print("KERNEL_OK")
</pallas_src>

<mosaic_0001>
module attributes {stable_mosaic.version = 11 : i64} {
  func.func @_ffn_softmax_kernel(%arg0: i32, %arg1: memref<8x32xf32, #tpu.memory_space<vmem>>, %arg2: memref<32x64xf32, #tpu.memory_space<vmem>>, %arg3: memref<1x64xf32, #tpu.memory_space<vmem>>, %arg4: memref<64x16xf32, #tpu.memory_space<vmem>>, %arg5: memref<1x16xf32, #tpu.memory_space<vmem>>, %arg6: memref<8x16xf32, #tpu.memory_space<vmem>>, %arg7: memref<8x64xf32, #tpu.memory_space<vmem>>) attributes {dimension_semantics = [#tpu.dimension_semantics<parallel>], iteration_bounds = array<i64: 1>, scalar_prefetch = 0 : i64, scratch_operands = 1 : i64, tpu.core_type = #tpu.core_type<tc>, window_params = [{transform_indices = @transform_0, window_bounds = array<i64: 8, 32>}, {pipeline_mode = #tpu.pipeline_mode<synchronous>, transform_indices = @transform_1, window_bounds = array<i64: 32, 64>}, {pipeline_mode = #tpu.pipeline_mode<synchronous>, transform_indices = @transform_2, window_bounds = array<i64: 1, 64>}, {pipeline_mode = #tpu.pipeline_mode<synchronous>, transform_indices = @transform_3, window_bounds = array<i64: 64, 16>}, {pipeline_mode = #tpu.pipeline_mode<synchronous>, transform_indices = @transform_4, window_bounds = array<i64: 1, 16>}, {transform_indices = @transform_5, window_bounds = array<i64: 8, 16>}]} {
    %c0 = arith.constant 0 : index
    %c0_0 = arith.constant 0 : index
    %0 = vector.load %arg1[%c0, %c0_0] : memref<8x32xf32, #tpu.memory_space<vmem>>, vector<8x32xf32>
    %c0_1 = arith.constant 0 : index
    %c0_2 = arith.constant 0 : index
    %1 = vector.load %arg2[%c0_1, %c0_2] : memref<32x64xf32, #tpu.memory_space<vmem>>, vector<32x64xf32>
    %cst = arith.constant dense<0.000000e+00> : vector<8x64xf32>
    %2 = tpu.matmul %0, %1, %cst {dimension_numbers = #tpu.dot_dimension_numbers<[1], [0], [0], [1], [0, 0, 1, 1], [], []>} : vector<8x32xf32>, vector<32x64xf32>, vector<8x64xf32> -> vector<8x64xf32>
    %c0_3 = arith.constant 0 : index
    %c0_4 = arith.constant 0 : index
    %3 = vector.load %arg3[%c0_3, %c0_4] : memref<1x64xf32, #tpu.memory_space<vmem>>, vector<1x64xf32>
    %4 = vector.broadcast %3 : vector<1x64xf32> to vector<8x64xf32>
    %5 = arith.addf %2, %4 : vector<8x64xf32>
    %6 = math.tanh %5 : vector<8x64xf32>
    %c0_5 = arith.constant 0 : index
    %c0_6 = arith.constant 0 : index
    %7 = vector.load %arg7[%c0_5, %c0_6] : memref<8x64xf32, #tpu.memory_space<vmem>>, vector<8x64xf32>
    tpu.vector_store %arg7[%c0_5, %c0_6], %6 {strides = array<i32>} : memref<8x64xf32, #tpu.memory_space<vmem>>, vector<8x64xf32>,
    %c0_7 = arith.constant 0 : index
    %c0_8 = arith.constant 0 : index
    %8 = vector.load %arg7[%c0_7, %c0_8] : memref<8x64xf32, #tpu.memory_space<vmem>>, vector<8x64xf32>
    %c0_9 = arith.constant 0 : index
    %c0_10 = arith.constant 0 : index
    %9 = vector.load %arg4[%c0_9, %c0_10] : memref<64x16xf32, #tpu.memory_space<vmem>>, vector<64x16xf32>
    %cst_11 = arith.constant dense<0.000000e+00> : vector<8x16xf32>
    %10 = tpu.matmul %8, %9, %cst_11 {dimension_numbers = #tpu.dot_dimension_numbers<[1], [0], [0], [1], [0, 0, 1, 1], [], []>} : vector<8x64xf32>, vector<64x16xf32>, vector<8x16xf32> -> vector<8x16xf32>
    %c0_12 = arith.constant 0 : index
    %c0_13 = arith.constant 0 : index
    %11 = vector.load %arg5[%c0_12, %c0_13] : memref<1x16xf32, #tpu.memory_space<vmem>>, vector<1x16xf32>
    %12 = vector.broadcast %11 : vector<1x16xf32> to vector<8x16xf32>
    %13 = arith.addf %10, %12 : vector<8x16xf32>
    %cst_14 = arith.constant dense<0xFF800000> : vector<8xf32>
    %14 = vector.multi_reduction <maximumf>, %13, %cst_14 [1] : vector<8x16xf32> to vector<8xf32>
    %15 = vector.shape_cast %14 : vector<8xf32> to vector<8x1xf32>
    %16 = vector.broadcast %15 : vector<8x1xf32> to vector<8x16xf32>
    %17 = arith.subf %13, %16 : vector<8x16xf32>
    %18 = math.exp %17 : vector<8x16xf32>
    %cst_15 = arith.constant dense<0.000000e+00> : vector<8xf32>
    %19 = vector.multi_reduction <add>, %18, %cst_15 [1] : vector<8x16xf32> to vector<8xf32>
    %20 = vector.shape_cast %19 : vector<8xf32> to vector<8x1xf32>
    %21 = vector.broadcast %20 : vector<8x1xf32> to vector<8x16xf32>
    %22 = arith.divf %18, %21 : vector<8x16xf32>
    %c0_16 = arith.constant 0 : index
    %c0_17 = arith.constant 0 : index
    %23 = vector.load %arg6[%c0_16, %c0_17] : memref<8x16xf32, #tpu.memory_space<vmem>>, vector<8x16xf32>
    tpu.vector_store %arg6[%c0_16, %c0_17], %22 {strides = array<i32>} : memref<8x16xf32, #tpu.memory_space<vmem>>, vector<8x16xf32>,
    return
  }
  func.func @transform_0(%arg0: i32) -> (i32, i32) {
    %c0_i32 = arith.constant 0 : i32
    %c0_i32_0 = arith.constant 0 : i32
    return %arg0, %c0_i32 : i32, i32
  }
  func.func @transform_1(%arg0: i32) -> (i32, i32) {
    %c0_i32 = arith.constant 0 : i32
    %c0_i32_0 = arith.constant 0 : i32
    %c0_i32_1 = arith.constant 0 : i32
    return %c0_i32, %c0_i32_0 : i32, i32
  }
  func.func @transform_2(%arg0: i32) -> (i32, i32) {
    %c0_i32 = arith.constant 0 : i32
    %c0_i32_0 = arith.constant 0 : i32
    %c0_i32_1 = arith.constant 0 : i32
    return %c0_i32, %c0_i32_0 : i32, i32
  }
  func.func @transform_3(%arg0: i32) -> (i32, i32) {
    %c0_i32 = arith.constant 0 : i32
    %c0_i32_0 = arith.constant 0 : i32
    %c0_i32_1 = arith.constant 0 : i32
    return %c0_i32, %c0_i32_0 : i32, i32
  }
  func.func @transform_4(%arg0: i32) -> (i32, i32) {
    %c0_i32 = arith.constant 0 : i32
    %c0_i32_0 = arith.constant 0 : i32
    %c0_i32_1 = arith.constant 0 : i32
    return %c0_i32, %c0_i32_0 : i32, i32
  }
  func.func @transform_5(%arg0: i32) -> (i32, i32) {
    %c0_i32 = arith.constant 0 : i32
    %c0_i32_0 = arith.constant 0 : i32
    return %arg0, %c0_i32 : i32, i32
  }
}

</mosaic_0001>

<llo_original>
// kernel: tpu_custom_call.1
$region0: #{tpu_custom_call.1}
  #allocation0 [shape = 'u32[]', space=smem, size = 0x4, offset = 0x4, fixed_abs, tag = 'smem constant byte address 0x4 - core index']
  #allocation1 [shape = 'u32[72,128]{1,0:T(1,128)}', space=vmem, size = 0x9000, scoped, tag = 'internal scratch']
  #allocation2 [shape = 'f32[8,64]{1,0:T(8,128)}', space=vmem, size = 0x1000, scoped, tag = 'scratch operand']
  %s0 = inlined_call_operand.vmem [shape: f32[8,32], index: 0, kind: input, shape index: {}]
  %s1 = inlined_call_operand.vmem [shape: f32[32,64], index: 1, kind: input, shape index: {}]
  %s2 = inlined_call_operand.vmem [shape: f32[1,64], index: 2, kind: input, shape index: {}]
  %s3 = inlined_call_operand.vmem [shape: f32[64,16], index: 3, kind: input, shape index: {}]
  %s4 = inlined_call_operand.vmem [shape: f32[1,16], index: 4, kind: input, shape index: {}]
  %s5 = inlined_call_operand.hbm [shape: f32[8,16], index: 5, kind: output, shape index: {}]
  %s6 = sld [smem:[#allocation0]]
  $region30: #{tpu_custom_call.1} parent=0
    _
  %s8 = ssub.s32 1, %s6
  %s9 = scalar_select 0, %s8, %s6
  $region1: #{tpu_custom_call.1} parent=0
    #allocation3 [shape = 'u8[4096]{0}', space=vmem, size = 0x1000, scoped, tag = 'output window, operand 0, single buffered']
    #allocation4 [shape = 's32[1]{0}', space=sflag, size = 0x4, scoped, tag = 'scoped memory for tpu_custom_call.1']
    %10 = vsyncpa [#allocation4], 0
    // Predicated region
    $region2: #{tpu_custom_call.1} parent=1 // pred_check
      _
    $region3: #{tpu_custom_call.1} parent=1 // pred_check_branch
      %12 = sbr.rel (0) target = $region5
    $region4: #{tpu_custom_call.1} parent=1 // pred_region
      _
    $region5: #{tpu_custom_call.1} parent=1 // pred_fallthru
      _
    // Predicated region
    $region6: #{tpu_custom_call.1} parent=1 // pred_check
      _
    $region7: #{tpu_custom_call.1} parent=1 // pred_check_branch
      %14 = sbr.rel (0) target = $region9
    $region8: #{tpu_custom_call.1} parent=1 // pred_region
      _
    $region9: #{tpu_custom_call.1} parent=1 // pred_fallthru
      _
    // Predicated region
    $region10: #{tpu_custom_call.1} parent=1 // pred_check
      _
    $region11: #{tpu_custom_call.1} parent=1 // pred_check_branch
      %16 = sbr.rel (0) target = $region13
    $region12: #{tpu_custom_call.1} parent=1 // pred_region
      _
    $region13: #{tpu_custom_call.1} parent=1 // pred_fallthru
      _
    // Predicated region
    $region14: #{tpu_custom_call.1} parent=1 // pred_check
      _
    $region15: #{tpu_custom_call.1} parent=1 // pred_check_branch
      %18 = sbr.rel (0) target = $region17
    $region16: #{tpu_custom_call.1} parent=1 // pred_region
      _
    $region17: #{tpu_custom_call.1} parent=1 // pred_fallthru
      _
    // Predicated region
    $region18: #{tpu_custom_call.1} parent=1 // pred_check
      _
    $region19: #{tpu_custom_call.1} parent=1 // pred_check_branch
      %20 = sbr.rel (0) target = $region21
    $region20: #{tpu_custom_call.1} parent=1 // pred_region
      _
    $region21: #{tpu_custom_call.1} parent=1 // pred_fallthru
      _
    %v21 = vld [vmem:[%s0] sm:$0xff]
    %v22 = vld [vmem:[%s1] sm:$0xff]
    %v23 = vld [vmem:[%s1 + $0x8] sm:$0xff]
    %v24 = vld [vmem:[%s1 + $0x10] sm:$0xff]
    %v25 = vld [vmem:[%s1 + $0x18] sm:$0xff]
    %v26 = vld [vmem:[%s2] sm:$0x1]
    %v28 = vperm.slane %v26, 0
    %vm30 = vcmask 261120
    %v32 = vsel %vm30, %v21, 0
    %34 = vmatpush.msra.mxu0 0.0
    %35 = vmatpush.msra.mxu0 0.0
    %36 = vmatpush.msra.mxu0 0.0
    %37 = vmatpush.msra.mxu0 0.0
    %38 = vmatpush.msra.mxu0 0.0
    %39 = vmatpush.msra.mxu0 0.0
    %40 = vmatpush.msra.mxu0 0.0
    %41 = vmatpush.msra.mxu0 0.0
    %42 = vmatpush.msra.mxu0 0.0
    %43 = vmatpush.msra.mxu0 0.0
    %44 = vmatpush.msra.mxu0 0.0
    %45 = vmatpush.msra.mxu0 0.0
    %46 = vmatpush.msra.mxu0 %v25
    %47 = vmatpush.msra.mxu0 %v24
    %48 = vmatpush.msra.mxu0 %v23
    %49 = vmatpush.msra.mxu0 %v22
    %50 = vmatmul.f32.gmra.mxu0 %v32
    %v51 = vpop.f32.mrf.mxu0
    %v52 = vadd.f32 %v28, %v51
    %53 = vdwg.mxu0
    %v54 = vtanh.pop %v52
    %vm55 = vcmask 523264
    %56 = vst.msk [vmem:[#allocation2] sm:$0xff] %vm55, %v54
    %v57 = vld [vmem:[#allocation2] sm:$0xff]
    %v58 = vld [vmem:[%s3] sm:$0xff]
    %v59 = vld [vmem:[%s3 + $0x8] sm:$0xff]
    %v60 = vld [vmem:[%s3 + $0x10] sm:$0xff]
    %v61 = vld [vmem:[%s3 + $0x18] sm:$0xff]
    %v62 = vld [vmem:[%s3 + $0x20] sm:$0xff]
    %v63 = vld [vmem:[%s3 + $0x28] sm:$0xff]
    %v64 = vld [vmem:[%s3 + $0x30] sm:$0xff]
    %v65 = vld [vmem:[%s3 + $0x38] sm:$0xff]
    %v66 = vld [vmem:[%s4] sm:$0x1]
    %v68 = vperm.slane %v66, 0
    %v71 = vsel %vm55, %v57, 0
    %73 = vmatpush.msra.mxu0 0.0
    %74 = vmatpush.msra.mxu0 0.0
    %75 = vmatpush.msra.mxu0 0.0
    %76 = vmatpush.msra.mxu0 0.0
    %77 = vmatpush.msra.mxu0 0.0
    %78 = vmatpush.msra.mxu0 0.0
    %79 = vmatpush.msra.mxu0 0.0
    %80 = vmatpush.msra.mxu0 0.0
    %81 = vmatpush.msra.mxu0 %v65
    %82 = vmatpush.msra.mxu0 %v64
    %83 = vmatpush.msra.mxu0 %v63
    %84 = vmatpush.msra.mxu0 %v62
    %85 = vmatpush.msra.mxu0 %v61
    %86 = vmatpush.msra.mxu0 %v60
    %87 = vmatpush.msra.mxu0 %v59
    %88 = vmatpush.msra.mxu0 %v58
    %89 = vmatmul.f32.gmra.mxu0 %v71
    %v90 = vpop.f32.mrf.mxu0
    %v91 = vadd.f32 %v68, %v90
    %92 = vdwg.mxu0
    %vm93 = vcmask 130048
    %v94 = vsel %vm93, %v91, -inf
    %95 = vmax.xlane.f32.xlu0 %v94
    %v96 = vpop.xlane.xlu0 %95
    %v97 = vsub.f32 %v91, %v96
    %v98 = vmul.f32 %v97, 1.442695
    %v99 = vpow.pop %v98
    %v100 = vsel %vm93, %v99, 0.0
    %101 = vadd.xlane.f32.xlu0 %v100
    %v102 = vpop.xlane.xlu0 %101
    %v103 = vrcp.pop %v102
    %v104 = vmul.f32 %v102, %v103
    %v105 = vsub.f32 1.0, %v104
    %v106 = vmul.f32 %v103, %v105
    %v107 = vadd.f32 %v103, %v106
    %vm108 = vweird.f32 %v102
    %vm109 = vweird.f32 %v103
    %vm110 = vmor %vm108, %vm109
    %v111 = vsel %vm110, %v103, %v107
    %v112 = vand.u32 2147483647, %v102
    %vm113 = vcmp.eq.f32.partialorder %v112, 8.507059e+37
    %v114 = vand.u32 %v102, 2147483648
    %v115 = vor.u32 1.1754944e-38, %v114
    %v116 = vsel %vm113, %v115, %v111
    %v117 = vmul.f32 %v99, %v116
    %118 = vst.msk [vmem:[#allocation3] sm:$0xff] %vm93, %v117
    // Predicated region
    $region22: #{tpu_custom_call.1} parent=1 // pred_check
      _
    $region23: #{tpu_custom_call.1} parent=1 // pred_check_branch
      %120 = sbr.rel (0) target = $region25
    $region24: #{tpu_custom_call.1} parent=1 // pred_region
      %122 = vsyncadd [#allocation4], 0
      %s124 = sshll.u32 [#allocation3], 4
      %s125 = int_to_ptr.vmem [resolvable:$true] %s124
      %s126 = sshll.u32 %s5, 4
      %s127 = int_to_ptr.hbm [resolvable:$true] %s126
      %129 = dma.vmem_to_hbm [thread:$0]  %s125, 128, %s127, [#allocation4]
    $region25: #{tpu_custom_call.1} parent=1 // pred_fallthru
      _
    // Predicated region
    $region26: #{tpu_custom_call.1} parent=1 // pred_check
      _
    $region27: #{tpu_custom_call.1} parent=1 // pred_check_branch
      %131 = sbr.rel (0) target = $region29
    $region28: #{tpu_custom_call.1} parent=1 // pred_region
      %133 = dma.done [#allocation4], 128
    $region29: #{tpu_custom_call.1} parent=1 // pred_fallthru
      _
    %134 = vsyncpa [#allocation4], 1

</llo_original>
